<compile_context>
chip_gen: v7x
topology: tpu7x:2x2x1
jax: 0.10.0
libtpu: 0.0.40
codegen_flags: <defaults>
</compile_context>

<pallas_src>
import jax
import jax.numpy as jnp
from jax import lax
from jax.experimental import pallas as pl
from jax.experimental.pallas import tpu as pltpu


def _round_up(v, m):
    return (v + m - 1) // m * m


def _pick_block_batch(bs, target_steps=8):
    """Largest divisor of bs that still leaves >= min(target_steps, bs) grid steps."""
    best = 1
    for d in range(1, bs + 1):
        if bs % d == 0 and bs // d >= min(target_steps, bs):
            best = d
    return best


# Contract lhs dim 0 with rhs dim 0 ("transposed lhs" matmul on the MXU).
_TN_DIMS = (((0,), (0,)), ((), ()))


# ----------------------------- Pallas kernels --------------------------------
def _embed_kernel(x_ref, w_ref, b_ref, o_ref):
    # x: (B_blk, K, T) f32   w: (K, N) bf16   b: (1, N) f32  ->  o: (T, B_blk*N)
    b_blk = x_ref.shape[0]
    n = w_ref.shape[1]
    w = w_ref[...]
    bias = b_ref[...]
    for i in range(b_blk):                       # static, fully unrolled
        xi = x_ref[i].astype(jnp.bfloat16)       # cast in-kernel (no extra HBM pass)
        acc = lax.dot_general(xi, w, _TN_DIMS,
                              preferred_element_type=jnp.float32)
        o_ref[:, i * n:(i + 1) * n] = (acc + bias).astype(o_ref.dtype)


def _rotvel_kernel(x_ref, wp_ref, bp_ref, wv_ref, bv_ref, o_ref):
    # Fused pose/vel embedding: vel matmul over all T frames, pose matmul only
    # for frame 0 (single-row dot overwrites row 0).  Frame axis is never
    # tiled, so local row 0 is always global frame 0.
    b_blk = x_ref.shape[0]
    n = wv_ref.shape[1]
    wp = wp_ref[...]
    bp = bp_ref[...]
    wv = wv_ref[...]
    bv = bv_ref[...]
    for i in range(b_blk):
        xi = x_ref[i].astype(jnp.bfloat16)       # (K, T)
        vel = lax.dot_general(xi, wv, _TN_DIMS,
                              preferred_element_type=jnp.float32) + bv
        o_ref[:, i * n:(i + 1) * n] = vel.astype(o_ref.dtype)
        x0 = xi[:, 0:1]                          # (K, 1) -> frame 0 only
        pose = lax.dot_general(x0, wp, _TN_DIMS,
                               preferred_element_type=jnp.float32) + bp
        o_ref[0:1, i * n:(i + 1) * n] = pose.astype(o_ref.dtype)


# ----------------------------- pallas_call wrapper ----------------------------
def _run_embed(x_bkt, params, fused_rot_vel, latent_dim, out_dtype):
    """params: list of (w_padded (K, N_pad) bf16, b_padded (1, N_pad) f32)."""
    bs, K, T = x_bkt.shape
    n_pad = params[0][0].shape[1]
    out_itemsize = jnp.dtype(out_dtype).itemsize

    b_blk = _pick_block_batch(bs)
    grid = (bs // b_blk,)

    in_specs = [pl.BlockSpec((b_blk, K, T), lambda b: (b, 0, 0))]
    operands = [x_bkt]                           # f32; cast to bf16 in-kernel
    for w, bias in params:
        in_specs.append(pl.BlockSpec((K, n_pad), lambda b: (0, 0)))
        in_specs.append(pl.BlockSpec((1, n_pad), lambda b: (0, 0)))
        operands.extend([w, bias])

    # Output written as a (T, bs*N_pad) slab == free view of (T, bs, N_pad);
    # each grid step fills one lane-dense (T, B_blk*N_pad) column block.
    out_specs = pl.BlockSpec((T, b_blk * n_pad), lambda b: (0, b))
    out_shape = jax.ShapeDtypeStruct((T, bs * n_pad), out_dtype)

    # Scoped-VMEM budget: double-buffered x/out blocks + resident weight/bias
    # blocks (counted double-buffered to be safe) + headroom.
    x_blk_bytes = b_blk * K * T * 4
    out_blk_bytes = T * b_blk * n_pad * out_itemsize
    param_bytes = sum(w.size * 2 + bias.size * 4 for w, bias in params)
    vmem_limit = int(min(max(2 * (x_blk_bytes + out_blk_bytes)
                             + 2 * param_bytes + (2 << 20), 4 << 20), 32 << 20))

    if fused_rot_vel:
        flops = int(2 * bs * T * K * n_pad + 2 * bs * K * n_pad)
    else:
        flops = int(2 * bs * T * K * n_pad)
    bytes_accessed = int(
        x_bkt.size * 4
        + sum(w.size * 2 + bias.size * 4 for w, bias in params)
        + T * bs * n_pad * out_itemsize)

    kernel = _rotvel_kernel if fused_rot_vel else _embed_kernel

    out2d = pl.pallas_call(
        kernel,
        out_shape=out_shape,
        grid_spec=pltpu.PrefetchScalarGridSpec(
            num_scalar_prefetch=0,
            grid=grid,
            in_specs=in_specs,
            out_specs=out_specs,
        ),
        compiler_params=pltpu.CompilerParams(
            dimension_semantics=("parallel",),
            vmem_limit_bytes=vmem_limit,
        ),
        cost_estimate=pl.CostEstimate(
            flops=flops, transcendentals=0, bytes_accessed=bytes_accessed),
    )(*operands)

    out = out2d.reshape(T, bs, n_pad)            # free view
    if n_pad != latent_dim:
        # Production latent_dim is 128-aligned -> this is a no-op there; small
        # unaligned configs pay one extra output copy to strip the lane pad.
        out = out[:, :, :latent_dim]
    return out


# ----------------------------- Module port ------------------------------------
class InputProcess:
    """JAX/Pallas port of model/mdm.py:InputProcess.

    out_dtype=jnp.bfloat16 halves the largest HBM stream when the downstream
    transformer runs in bf16; accumulation / bias add stay f32 either way.
    """

    def __init__(self, data_rep, input_feats, latent_dim, key,
                 out_dtype=jnp.float32):
        self.data_rep = data_rep
        self.input_feats = input_feats
        self.latent_dim = latent_dim
        self.out_dtype = out_dtype
        self._n_pad = _round_up(latent_dim, 128)

        k1, k2, k3, k4 = jax.random.split(key, 4)
        bound = 1.0 / float(input_feats) ** 0.5

        def init_linear(kw, kb):
            # Stored pre-transposed: (K, N) so the kernel does x^T @ W.
            w = jax.random.uniform(kw, (input_feats, latent_dim),
                                   jnp.float32, -bound, bound)
            b = jax.random.uniform(kb, (1, latent_dim),
                                   jnp.float32, -bound, bound)
            return w, b

        self.pose_w, self.pose_b = init_linear(k1, k2)
        self._pose_packed = self._pack(self.pose_w, self.pose_b)
        if data_rep == "rot_vel":
            self.vel_w, self.vel_b = init_linear(k3, k4)
            self._vel_packed = self._pack(self.vel_w, self.vel_b)

    def _pack(self, w, b):
        pad = self._n_pad - self.latent_dim
        w_p = jnp.pad(w, ((0, 0), (0, pad))).astype(jnp.bfloat16)
        b_p = jnp.pad(b, ((0, 0), (0, pad))).astype(jnp.float32)
        return w_p, b_p

    def __call__(self, x):
        bs, njoints, nfeats, nframes = x.shape
        assert njoints * nfeats == self.input_feats
        # Free view of the native layout: (bs, K, nframes). No transpose pass,
        # no dtype cast (the kernel casts to bf16 tile-by-tile).
        x_bkt = x.reshape(bs, self.input_feats, nframes)

        if self.data_rep in ["rot6d", "xyz", "hml_vec"]:
            return _run_embed(x_bkt, [self._pose_packed], False,
                              self.latent_dim, self.out_dtype)
        elif self.data_rep == "rot_vel":
            return _run_embed(x_bkt, [self._pose_packed, self._vel_packed],
                              True, self.latent_dim, self.out_dtype)
        else:
            raise ValueError


# ----------------------------- Reference (pure JAX) ---------------------------
def _reference(mod, x, quantize=False):
    bs, nj, nf, T = x.shape
    hp = lax.Precision.HIGHEST
    q = (lambda a: a.astype(jnp.bfloat16).astype(jnp.float32)) if quantize \
        else (lambda a: a)
    xr = jnp.transpose(x, (3, 0, 1, 2)).reshape(T, bs, nj * nf)
    xr = q(xr)
    if mod.data_rep in ["rot6d", "xyz", "hml_vec"]:
        return jnp.einsum("tbk,kn->tbn", xr, q(mod.pose_w),
                          precision=hp) + mod.pose_b
    fp = jnp.einsum("tbk,kn->tbn", xr[:1], q(mod.pose_w),
                    precision=hp) + mod.pose_b
    vl = jnp.einsum("tbk,kn->tbn", xr[1:], q(mod.vel_w),
                    precision=hp) + mod.vel_b
    return jnp.concatenate((fp, vl), axis=0)


# ----------------------------- Demo --------------------------------------------
if __name__ == "__main__":
    key = jax.random.PRNGKey(0)
    k_x, k_p1, k_p2 = jax.random.split(key, 3)

    bs, njoints, nfeats, nframes = 2, 4, 4, 8
    input_feats = njoints * nfeats      # 16
    latent_dim = 32                     # exercises the N->128 lane padding path

    x = jax.random.normal(k_x, (bs, njoints, nfeats, nframes), jnp.float32)

    # Branch 1: plain pose embedding ('hml_vec' / 'rot6d' / 'xyz')
    mod = InputProcess("hml_vec", input_feats, latent_dim, k_p1)
    out = jax.block_until_ready(mod(x))
    assert out.shape == (nframes, bs, latent_dim)
    ref_q = _reference(mod, x, quantize=True)     # same bf16 quantization
    ref_f = _reference(mod, x, quantize=False)    # full-f32 semantics check
    assert jnp.allclose(out, ref_q, atol=2e-3, rtol=2e-3)
    assert jnp.allclose(out, ref_f, atol=5e-2, rtol=5e-2)

    # Same branch with bf16 output (downstream-bf16 fast path)
    mod_bf = InputProcess("hml_vec", input_feats, latent_dim, k_p1,
                          out_dtype=jnp.bfloat16)
    out_bf = jax.block_until_ready(mod_bf(x))
    assert out_bf.shape == (nframes, bs, latent_dim)
    assert out_bf.dtype == jnp.bfloat16
    assert jnp.allclose(out_bf.astype(jnp.float32), ref_q, atol=5e-2, rtol=5e-2)

    # Branch 2: 'rot_vel' (frame 0 via poseEmbedding, frames 1.. via velEmbedding)
    mod_rv = InputProcess("rot_vel", input_feats, latent_dim, k_p2)
    out_rv = jax.block_until_ready(mod_rv(x))
    assert out_rv.shape == (nframes, bs, latent_dim)
    ref_rv_q = _reference(mod_rv, x, quantize=True)
    ref_rv_f = _reference(mod_rv, x, quantize=False)
    assert jnp.allclose(out_rv, ref_rv_q, atol=2e-3, rtol=2e-3)
    assert jnp.allclose(out_rv, ref_rv_f, atol=5e-2, rtol=5e-2)

    print("KERNEL_OK")
</pallas_src>

<mosaic_0001>
module attributes {stable_mosaic.version = 11 : i64} {
  func.func @_embed_kernel(%arg0: i32, %arg1: memref<1x16x8xf32, #tpu.memory_space<vmem>>, %arg2: memref<16x128xbf16, #tpu.memory_space<vmem>>, %arg3: memref<1x128xf32, #tpu.memory_space<vmem>>, %arg4: memref<8x128xf32, #tpu.memory_space<vmem>>) attributes {dimension_semantics = [#tpu.dimension_semantics<parallel>], iteration_bounds = array<i64: 2>, scalar_prefetch = 0 : i64, scratch_operands = 0 : i64, tpu.core_type = #tpu.core_type<tc>, window_params = [{transform_indices = @transform_0, window_bounds = array<i64: 1, 16, 8>}, {pipeline_mode = #tpu.pipeline_mode<synchronous>, transform_indices = @transform_1, window_bounds = array<i64: 16, 128>}, {pipeline_mode = #tpu.pipeline_mode<synchronous>, transform_indices = @transform_2, window_bounds = array<i64: 1, 128>}, {transform_indices = @transform_3, window_bounds = array<i64: 8, 128>}]} {
    %c0 = arith.constant 0 : index
    %c0_0 = arith.constant 0 : index
    %0 = vector.load %arg2[%c0, %c0_0] : memref<16x128xbf16, #tpu.memory_space<vmem>>, vector<16x128xbf16>
    %c0_1 = arith.constant 0 : index
    %c0_2 = arith.constant 0 : index
    %1 = vector.load %arg3[%c0_1, %c0_2] : memref<1x128xf32, #tpu.memory_space<vmem>>, vector<1x128xf32>
    %c0_3 = arith.constant 0 : index
    %c0_4 = arith.constant 0 : index
    %c0_5 = arith.constant 0 : index
    %2 = vector.load %arg1[%c0_3, %c0_4, %c0_5] : memref<1x16x8xf32, #tpu.memory_space<vmem>>, vector<1x16x8xf32>
    %3 = vector.shape_cast %2 : vector<1x16x8xf32> to vector<16x8xf32>
    %4 = arith.truncf %3 : vector<16x8xf32> to vector<16x8xbf16>
    %cst = arith.constant dense<0.000000e+00> : vector<8x128xf32>
    %5 = tpu.matmul %4, %0, %cst {dimension_numbers = #tpu.dot_dimension_numbers<[0], [0], [1], [1], [0, 1, 1, 1], [], []>} : vector<16x8xbf16>, vector<16x128xbf16>, vector<8x128xf32> -> vector<8x128xf32>
    %6 = vector.broadcast %1 : vector<1x128xf32> to vector<8x128xf32>
    %7 = arith.addf %5, %6 : vector<8x128xf32>
    %c0_6 = arith.constant 0 : index
    %c0_7 = arith.constant 0 : index
    %8 = vector.load %arg4[%c0_6, %c0_7] : memref<8x128xf32, #tpu.memory_space<vmem>>, vector<8x128xf32>
    tpu.vector_store %arg4[%c0_6, %c0_7], %7 {strides = array<i32>} : memref<8x128xf32, #tpu.memory_space<vmem>>, vector<8x128xf32>,
    return
  }
  func.func @transform_0(%arg0: i32) -> (i32, i32, i32) {
    %c0_i32 = arith.constant 0 : i32
    %c0_i32_0 = arith.constant 0 : i32
    %c0_i32_1 = arith.constant 0 : i32
    return %arg0, %c0_i32, %c0_i32_0 : i32, i32, i32
  }
  func.func @transform_1(%arg0: i32) -> (i32, i32) {
    %c0_i32 = arith.constant 0 : i32
    %c0_i32_0 = arith.constant 0 : i32
    %c0_i32_1 = arith.constant 0 : i32
    return %c0_i32, %c0_i32_0 : i32, i32
  }
  func.func @transform_2(%arg0: i32) -> (i32, i32) {
    %c0_i32 = arith.constant 0 : i32
    %c0_i32_0 = arith.constant 0 : i32
    %c0_i32_1 = arith.constant 0 : i32
    return %c0_i32, %c0_i32_0 : i32, i32
  }
  func.func @transform_3(%arg0: i32) -> (i32, i32) {
    %c0_i32 = arith.constant 0 : i32
    %c0_i32_0 = arith.constant 0 : i32
    return %c0_i32, %arg0 : i32, i32
  }
}

</mosaic_0001>

<llo_original>
// kernel: tpu_custom_call.1
$region0: #{tpu_custom_call.1}
  #allocation0 [shape = 'u32[]', space=smem, size = 0x4, offset = 0x4, fixed_abs, tag = 'smem constant byte address 0x4 - core index']
  #allocation1 [shape = 'u32[144,128]{1,0:T(1,128)}', space=vmem, size = 0x12000, scoped, tag = 'internal scratch']
  %s0 = inlined_call_operand.vmem [shape: f32[2,16,8], index: 0, kind: input, shape index: {}]
  %s1 = inlined_call_operand.vmem [shape: bf16[16,128], index: 1, kind: input, shape index: {}]
  %s2 = inlined_call_operand.vmem [shape: f32[1,128], index: 2, kind: input, shape index: {}]
  %s3 = inlined_call_operand.hbm [shape: f32[8,256], index: 3, kind: output, shape index: {}]
  %s4 = sld [smem:[#allocation0]]
  $region45: #{tpu_custom_call.1} parent=0
    _
  %s6 = ssub.s32 1, %s4
  %s7 = scalar_select 0, %s6, %s4
  $region1: #{tpu_custom_call.1} parent=0
    #allocation2 [shape = 'u8[8192]{0}', space=vmem, size = 0x2000, scoped, tag = 'output window, operand 0']
    #allocation3 [shape = 's32[2]{0}', space=sflag, size = 0x8, scoped, tag = 'scoped memory for tpu_custom_call.1']
    %8 = vsyncpa [#allocation3], 0
    %s9 = scalar_lea.sflag [#allocation3], 1
    %10 = vsyncpa %s9, 0
    loop: start=0, step=1, limit=4
    $region2: #{tpu_custom_call.1} parent=1 // loop_pre_header
      _
    $region3: #{tpu_custom_call.1} parent=1 // loop_header
      %s12 = sphi 0, %s16
      %p13 = scmp.ge.s32.totalorder %s12, 4
      %s22 = sphi 0, %s24
      %s25 = sphi 0, %s22
      %s26 = sphi 0, %s25
      %s42 = sphi 0, %s26
      %s46 = sphi 0, %s46
      %s48 = sphi 0, %s46
      %s49 = sphi 0, %s48
      %s63 = sphi 0, %s49
      %s67 = sphi 0, %s67
      %s69 = sphi 0, %s67
      %s70 = sphi 0, %s69
      %s84 = sphi 0, %s70
      %s90 = sphi 0, %s92
      %s93 = sphi 0, %s90
      %s94 = sphi 0, %s93
      %s110 = sphi 0, %s94
    $region4: #{tpu_custom_call.1} parent=1 // loop_header_branch
      %15 = sbr.rel (%p13) target = $region8
    $region5: #{tpu_custom_call.1} parent=1 // loop_body
      %s17 = ssub.s32 %s12, 1
      %s18 = ssub.s32 %s12, 2
      %s19 = sadd.s32 %s12, 1
      %s20 = ssub.s32 %s12, %s19
      %p21 = scmp.eq.s32.totalorder %s20, 0
      %s23 = sadd.s32 %s22, 1
      %s24 = scalar_select %p21, %s22, %s23
      %p27 = pneg %p21
      %p28 = scmp.eq.s32.totalorder %s12, 1
      %p29 = por %p27, %p28
      %p30 = scmp.ne.s32.totalorder %s22, %s25
      %p31 = scmp.eq.s32.totalorder %s12, 0
      %p32 = por %p30, %p31
      %p33 = scmp.ne.s32.totalorder %s22, %s25
      %p34 = scmp.eq.s32.totalorder %s17, 1
      %p35 = por %p33, %p34
      %p36 = scmp.ne.s32.totalorder %s25, %s26
      %p37 = scmp.eq.s32.totalorder %s17, 0
      %p38 = por %p36, %p37
      %p39 = scmp.ne.s32.totalorder %s25, %s26
      %p40 = scmp.eq.s32.totalorder %s18, 1
      %p41 = por %p39, %p40
      %p43 = scmp.ne.s32.totalorder %s26, %s42
      %p44 = scmp.eq.s32.totalorder %s18, 0
      %p45 = por %p43, %p44
      %s47 = sadd.s32 %s46, 1
      %p50 = scmp.eq.s32.totalorder %s12, 1
      %p51 = scmp.ne.s32.totalorder %s46, %s48
      %p52 = scmp.eq.s32.totalorder %s12, 0
      %p53 = por %p51, %p52
      %p54 = scmp.ne.s32.totalorder %s46, %s48
      %p55 = scmp.eq.s32.totalorder %s17, 1
      %p56 = por %p54, %p55
      %p57 = scmp.ne.s32.totalorder %s48, %s49
      %p58 = scmp.eq.s32.totalorder %s17, 0
      %p59 = por %p57, %p58
      %p60 = scmp.ne.s32.totalorder %s48, %s49
      %p61 = scmp.eq.s32.totalorder %s18, 1
      %p62 = por %p60, %p61
      %p64 = scmp.ne.s32.totalorder %s49, %s63
      %p65 = scmp.eq.s32.totalorder %s18, 0
      %p66 = por %p64, %p65
      %s68 = sadd.s32 %s67, 1
      %p71 = scmp.eq.s32.totalorder %s12, 1
      %p72 = scmp.ne.s32.totalorder %s67, %s69
      %p73 = scmp.eq.s32.totalorder %s12, 0
      %p74 = por %p72, %p73
      %p75 = scmp.ne.s32.totalorder %s67, %s69
      %p76 = scmp.eq.s32.totalorder %s17, 1
      %p77 = por %p75, %p76
      %p78 = scmp.ne.s32.totalorder %s69, %s70
      %p79 = scmp.eq.s32.totalorder %s17, 0
      %p80 = por %p78, %p79
      %p81 = scmp.ne.s32.totalorder %s69, %s70
      %p82 = scmp.eq.s32.totalorder %s18, 1
      %p83 = por %p81, %p82
      %p85 = scmp.ne.s32.totalorder %s70, %s84
      %p86 = scmp.eq.s32.totalorder %s18, 0
      %p87 = por %p85, %p86
      %s88 = ssub.s32 %s12, %s19
      %p89 = scmp.eq.s32.totalorder %s88, 0
      %s91 = sadd.s32 %s90, 1
      %s92 = scalar_select %p89, %s90, %s91
      %p95 = pneg %p89
      %p96 = scmp.eq.s32.totalorder %s12, 1
      %p97 = por %p95, %p96
      %p98 = scmp.ne.s32.totalorder %s90, %s93
      %p99 = scmp.eq.s32.totalorder %s12, 0
      %p100 = por %p98, %p99
      %p101 = scmp.ne.s32.totalorder %s90, %s93
      %p102 = scmp.eq.s32.totalorder %s17, 1
      %p103 = por %p101, %p102
      %p104 = scmp.ne.s32.totalorder %s93, %s94
      %p105 = scmp.eq.s32.totalorder %s17, 0
      %p106 = por %p104, %p105
      %p107 = scmp.ne.s32.totalorder %s93, %s94
      %p108 = scmp.eq.s32.totalorder %s18, 1
      %p109 = por %p107, %p108
      %p111 = scmp.ne.s32.totalorder %s94, %s110
      %p112 = scmp.eq.s32.totalorder %s18, 0
      %p113 = por %p111, %p112
      %p114 = scmp.le.s32.totalorder 1, %s12
      %p115 = scmp.lt.s32.totalorder %s12, 3
      %p116 = pnand %p114, %p115
      %p117 = pneg %p116
      // Predicated region
      $region9: #{tpu_custom_call.1} parent=5 // pred_check
        _
      $region10: #{tpu_custom_call.1} parent=5 // pred_check_branch
        %119 = sbr.rel (%p116) target = $region12
      $region11: #{tpu_custom_call.1} parent=5 // pred_region
        %s120 = ssub.s32 %s12, 1
        // Predicated region
        $region13: #{tpu_custom_call.1} parent=11 // pred_check
          %p121 = pneg %p59
        $region14: #{tpu_custom_call.1} parent=11 // pred_check_branch
          %123 = sbr.rel (%p121) target = $region16
        $region15: #{tpu_custom_call.1} parent=11 // pred_region
          _
        $region16: #{tpu_custom_call.1} parent=11 // pred_fallthru
          _
        // Predicated region
        $region17: #{tpu_custom_call.1} parent=11 // pred_check
          %p124 = pneg %p80
        $region18: #{tpu_custom_call.1} parent=11 // pred_check_branch
          %126 = sbr.rel (%p124) target = $region20
        $region19: #{tpu_custom_call.1} parent=11 // pred_region
          _
        $region20: #{tpu_custom_call.1} parent=11 // pred_fallthru
          _
      $region12: #{tpu_custom_call.1} parent=5 // pred_fallthru
        _
      %p127 = scmp.lt.s32.totalorder %s12, 2
      // Predicated region
      $region21: #{tpu_custom_call.1} parent=5 // pred_check
        %p128 = pneg %p127
      $region22: #{tpu_custom_call.1} parent=5 // pred_check_branch
        %130 = sbr.rel (%p128) target = $region24
      $region23: #{tpu_custom_call.1} parent=5 // pred_region
        // Predicated region
        $region25: #{tpu_custom_call.1} parent=23 // pred_check
          %p131 = pneg %p32
        $region26: #{tpu_custom_call.1} parent=23 // pred_check_branch
          %133 = sbr.rel (%p131) target = $region28
        $region27: #{tpu_custom_call.1} parent=23 // pred_region
          %p134 = scmp.lt.s32.totalorder %s12, 1
          %s135 = scalar_select %p134, %s12, 1
          %s136 = smul.addr %s135, 2
          %s137 = smul.addr %s136, 8
          %s138 = scalar_lea.vmem %s0, %s137
        $region28: #{tpu_custom_call.1} parent=23 // pred_fallthru
          _
      $region24: #{tpu_custom_call.1} parent=5 // pred_fallthru
        _
      %p139 = scmp.le.s32.totalorder 1, %s12
      %p140 = scmp.lt.s32.totalorder %s12, 3
      %p141 = pnand %p139, %p140
      %p142 = pneg %p141
      // Predicated region
      $region29: #{tpu_custom_call.1} parent=5 // pred_check
        _
      $region30: #{tpu_custom_call.1} parent=5 // pred_check_branch
        %144 = sbr.rel (%p141) target = $region32
      $region31: #{tpu_custom_call.1} parent=5 // pred_region
        %s145 = ssub.s32 %s12, 1
        %p146 = scmp.lt.s32.totalorder %s17, 1
        %s147 = scalar_select %p146, %s17, 1
        %s148 = smul.addr %s147, 2
        %s149 = smul.addr %s148, 8
        %s150 = scalar_lea.vmem %s0, %s149
        %p151 = pneg %p38
        %p152 = pneg %p35
        %p153 = pneg %p59
        %p154 = pneg %p56
        %p155 = pneg %p80
        %p156 = pneg %p77
        %p157 = pneg %p106
        %p158 = pneg %p103
        %s159 = sand.u32 %s93, 1
        %s160 = scalar_lea.sflag [#allocation3], %s159
        %s161 = sand.u32 %s93, 1
        %s162 = smul.addr %s161, 8
        %s163 = scalar_lea.vmem [#allocation2], %s162
        %p164 = scmp.lt.s32.totalorder %s17, 1
        %s165 = scalar_select %p164, %s17, 1
        %s166 = smul.addr %s165, 2
        %s167 = smul.addr %s166, 8
        %s168 = scalar_lea.vmem %s0, %s167
        %v170 = vld [vmem:[%s1] sm:$0xf]
        %v171 = vld [vmem:[%s1 + $0x4] sm:$0xf]
        %v172 = vld [vmem:[%s2] sm:$0x1]
        %v173 = vld [vmem:[%s168] sm:$0xff]
        %v174 = vld [vmem:[%s168 + $0x8] sm:$0xff]
        %v175 = vpack.c.bf16 %v174, %v173
        %v177 = vlaneseq
        %v178 = vshrl.u32 %v177, 7
        %v179 = vsub.s32 0, %v178
        %v180 = vrot.slane %v172, %v179
        %182 = vxpose.xlu0.c.b16.start [1/8] %v175, 128
        %183 = vxpose.xlu0.c.b16.cont [2/8] 0, 128
        %184 = vxpose.xlu0.c.b16.cont [3/8] 0, 128
        %185 = vxpose.xlu0.c.b16.cont [4/8] 0, 128
        %186 = vxpose.xlu0.c.b16.cont [5/8] 0, 128
        %187 = vxpose.xlu0.c.b16.cont [6/8] 0, 128
        %188 = vxpose.xlu0.c.b16.cont [7/8] 0, 128
        %189 = vxpose.xlu0.c.b16.end [8/8] 0, 128
        %v190 = vpop.trf.xlu0
        %v191 = vpop.trf.xlu0
        %v192 = vpop.trf.xlu0
        %v193 = vpop.trf.xlu0
        %v194 = vpop.trf.xlu0
        %v195 = vpop.trf.xlu0
        %v196 = vpop.trf.xlu0
        %v197 = vpop.trf.xlu0
        %v200 = vunpack.c.l.b16 %v170
        %v201 = vunpack.c.l.b16 %v171
        %v202 = vpack.c.b16 %v201, %v200
        %vm204 = vcmask 130048
        %v206 = vsel %vm204, %v190, 0
        %208 = vmatprep.subr.bf16.mxu0 0
        %209 = vmatpush1.bf16.msra.mxu0 %v202
        %210 = vmatprep.subr.bf16.mxu0 0
        %211 = vmatpush1.bf16.msra.mxu0 0
        %212 = vmatprep.subr.bf16.mxu0 0
        %213 = vmatpush1.bf16.msra.mxu0 0
        %214 = vmatprep.subr.bf16.mxu0 0
        %215 = vmatpush1.bf16.msra.mxu0 0
        %216 = vmatprep.subr.bf16.mxu0 0
        %217 = vmatpush1.bf16.msra.mxu0 0
        %218 = vmatprep.subr.bf16.mxu0 0
        %219 = vmatpush1.bf16.msra.mxu0 0
        %220 = vmatprep.subr.bf16.mxu0 0
        %221 = vmatpush1.bf16.msra.mxu0 0
        %222 = vmatprep.subr.bf16.mxu0 0
        %223 = vmatpush1.bf16.msra.mxu0 0
        %224 = vmatprep.subr.bf16.mxu0 0
        %225 = vmatpush1.bf16.msra.mxu0 0
        %226 = vmatprep.subr.bf16.mxu0 0
        %227 = vmatpush1.bf16.msra.mxu0 0
        %228 = vmatprep.subr.bf16.mxu0 0
        %229 = vmatpush1.bf16.msra.mxu0 0
        %230 = vmatprep.subr.bf16.mxu0 0
        %231 = vmatpush1.bf16.msra.mxu0 0
        %232 = vmatprep.subr.bf16.mxu0 0
        %233 = vmatpush1.bf16.msra.mxu0 0
        %234 = vmatprep.subr.bf16.mxu0 0
        %235 = vmatpush1.bf16.msra.mxu0 0
        %236 = vmatprep.subr.bf16.mxu0 0
        %237 = vmatpush1.bf16.msra.mxu0 0
        %238 = vmatprep.subr.bf16.mxu0 0
        %239 = vmatpush1.bf16.msra.mxu0 0
        %240 = vmatprep.mubr.bf16.mxu0 0
        %241 = vmatmul.mubr.bf16.gmra.mrb[0].mxu0 %v206
        %v242 = vpop.f32.mrb[0].mxu0
        %v243 = vadd.f32 %v180, %v242
        %v244 = vpop.f32.mrb[0].mxu0
        %v245 = vpop.f32.mrb[0].mxu0
        %v246 = vpop.f32.mrb[0].mxu0
        %247 = vdwg.mxu0
        %248 = vst [vmem:[%s163] sm:$0xff] %v243
        %s249 = sand.u32 %s93, 1
        %s250 = scalar_lea.sflag [#allocation3], %s249
        %s251 = sand.u32 %s93, 1
        %s252 = smul.addr %s251, 8
        %s253 = scalar_lea.vmem [#allocation2], %s252
        // Predicated region
        $region33: #{tpu_custom_call.1} parent=31 // pred_check
          %p254 = pneg %p103
        $region34: #{tpu_custom_call.1} parent=31 // pred_check_branch
          %256 = sbr.rel (%p254) target = $region36
        $region35: #{tpu_custom_call.1} parent=31 // pred_region
          %s258 = ssub.s32 128, 128
          %259 = vsyncadd %s250, %s258
          %s260 = smul.addr %s17, 128
          %s261 = scalar_lea.hbm %s3, %s260
          %s263 = sshll.u32 %s253, 4
          %s264 = int_to_ptr.vmem [resolvable:$true] %s263
          %266 = dma.vmem_to_hbm [thread:$0]  %s264, 128, %s261, %s250
        $region36: #{tpu_custom_call.1} parent=31 // pred_fallthru
          _
      $region32: #{tpu_custom_call.1} parent=5 // pred_fallthru
        _
      %p267 = scmp.le.s32.totalorder 2, %s12
      // Predicated region
      $region37: #{tpu_custom_call.1} parent=5 // pred_check
        %p268 = pneg %p267
      $region38: #{tpu_custom_call.1} parent=5 // pred_check_branch
        %270 = sbr.rel (%p268) target = $region40
      $region39: #{tpu_custom_call.1} parent=5 // pred_region
        %s271 = ssub.s32 %s12, 2
        // Predicated region
        $region41: #{tpu_custom_call.1} parent=39 // pred_check
          %p272 = pneg %p109
        $region42: #{tpu_custom_call.1} parent=39 // pred_check_branch
          %274 = sbr.rel (%p272) target = $region44
        $region43: #{tpu_custom_call.1} parent=39 // pred_region
          %s275 = sand.u32 %s94, 1
          %s276 = scalar_lea.sflag [#allocation3], %s275
          %s277 = sand.u32 %s94, 1
          %s278 = smul.addr %s277, 8
          %s279 = scalar_lea.vmem [#allocation2], %s278
          %280 = dma.done %s276, 128
        $region44: #{tpu_custom_call.1} parent=39 // pred_fallthru
          _
      $region40: #{tpu_custom_call.1} parent=5 // pred_fallthru
        _
    $region6: #{tpu_custom_call.1} parent=1 // loop_footer
      %s16 = sadd.s32 1, %s12
    $region7: #{tpu_custom_call.1} parent=1 // loop_footer_branch
      %11 = sbr.rel target = $region3
    $region8: #{tpu_custom_call.1} parent=1 // loop_exit
      _
    %281 = vsyncpa [#allocation3], 1
    %s282 = scalar_lea.sflag [#allocation3], 1
    %283 = vsyncpa %s282, 1

</llo_original>
